<compile_context>
chip_gen: v5e
topology: v5e:2x2
jax: 0.10.0
libtpu: 0.0.40
codegen_flags: <defaults>
</compile_context>

<pallas_src>
import functools

import numpy as np
import jax
import jax.numpy as jnp
from jax.experimental import pallas as pl
from jax.experimental.pallas import tpu as pltpu


def _round_up(x, m):
    return ((x + m - 1) // m) * m


@functools.lru_cache(maxsize=None)
def _tpu_limits():
    """(vmem_limit_bytes, block_budget_bytes, n_tensorcores), per generation."""
    cap = 64 << 20          # conservative fallback = v7x per-core VMEM
    cores = 1
    try:
        info = pltpu.get_tpu_info()
        c = int(getattr(info, "vmem_capacity_bytes", 0) or 0)
        if c > 0:
            cap = c
        for name in ("num_cores", "core_count", "num_tensorcores"):
            n = int(getattr(info, name, 0) or 0)
            if n >= 1:
                cores = n
                break
    except Exception:
        pass
    if cores == 1:
        try:
            cores = max(1, int(getattr(jax.devices()[0], "num_cores", 1) or 1))
        except Exception:
            cores = 1
    vmem_limit = min(max(24 << 20, (cap * 3) // 4), 112 << 20, cap)
    # 2x double-buffered input block + single-vreg accumulator + slack.
    block_budget = max(2 << 20, min(12 << 20, (vmem_limit - (2 << 20)) // 2))
    return int(vmem_limit), int(block_budget), int(cores)


# ---------------------------------------------------------------------------
# Pallas kernel: accumulate per-element squared deviations over the K axis.
# ---------------------------------------------------------------------------
def _group_variance_kernel(x_ref, o_ref, acc_ref):
    """x_ref: (K, Gt, Dt) block.  acc_ref: single-vreg (8, 128) f32 running sum
    of sum_k (x_k - mean)^2, folded with tile-aligned static slices (pure VPU
    adds).  o_ref: (1, 8, 128) per-core partial, written only on the last
    step of this core's sub-grid."""
    gb, db = pl.program_id(1), pl.program_id(2)

    @pl.when(jnp.logical_and(gb == 0, db == 0))
    def _():
        acc_ref[...] = jnp.zeros_like(acc_ref)

    k_copies, gt, dt = x_ref.shape

    # One-pass shifted-moment variance (shift = copy 0): every copy is loaded
    # and converted to f32 exactly once.  Safe here because augmented copies
    # of one sample are nearly identical, so the shift removes the mean almost
    # exactly (no catastrophic cancellation).
    x0 = x_ref[0].astype(jnp.float32)
    sd = jnp.zeros_like(x0)
    sdd = jnp.zeros_like(x0)
    for k in range(1, k_copies):
        dk = x_ref[k].astype(jnp.float32) - x0
        sd = sd + dk
        sdd = sdd + dk * dk
    # sum_k (x_k - mean)^2 = sum d^2 - (sum d)^2 / K
    ss = sdd - sd * sd * jnp.float32(1.0 / k_copies)

    # Fold the (Gt, Dt) slab into one (8, 128) vreg: sublane fold then lane
    # fold, both with tile-aligned static slices -> elementwise vreg adds
    # only (no XLU, no relayout).  Hidden under the input DMA.
    sub = ss[0:8, :]
    for t in range(1, gt // 8):
        sub = sub + ss[8 * t:8 * (t + 1), :]
    tile = sub[:, 0:128]
    for j in range(1, dt // 128):
        tile = tile + sub[:, 128 * j:128 * (j + 1)]
    acc_ref[...] = acc_ref[...] + tile

    @pl.when(jnp.logical_and(gb == pl.num_programs(1) - 1,
                             db == pl.num_programs(2) - 1))
    def _():
        o_ref[0] = acc_ref[...]


def _choose_tiles(n_groups, k_copies, d, itemsize, block_budget, n_cores):
    """Pick (gt, dt, d_pad, g_pad, gb_per_core, n_db, n_cores_used)."""
    sub_align = max(8, 32 // itemsize)          # f32 -> 8, bf16 -> 16, int8 -> 32
    d_pad = _round_up(d, 128)
    bytes_per_group = k_copies * d_pad * itemsize
    min_block = sub_align * bytes_per_group

    if min_block <= block_budget:
        # Full feature dim per block; as many groups as the budget allows.
        dt, n_db = d_pad, 1
        gt_max = (block_budget // bytes_per_group) // sub_align * sub_align
        gt_max = min(max(sub_align, gt_max), _round_up(n_groups, sub_align))
        n_gb = -(-n_groups // gt_max)
        if n_cores > 1 and n_groups >= 2 * sub_align:
            # Enough work to split across TensorCores: balance the blocks.
            n_gb = max(n_gb, min(n_cores, n_groups // sub_align))
        gt = min(gt_max, _round_up(-(-n_groups // n_gb), sub_align))
    else:
        # Even sub_align groups at full D exceed the budget -> tile the
        # feature (lane) dim as well; keeps blocks inside VMEM on every
        # generation (critical on v7x's 64 MiB).
        gt = sub_align
        dt_cap = max(128, (block_budget // (k_copies * gt * itemsize)) // 128 * 128)
        n_db = -(-d_pad // dt_cap)
        dt = _round_up(-(-d_pad // n_db), 128)
        d_pad = dt * n_db

    n_gb = -(-n_groups // gt)
    n_cores_used = max(1, min(n_cores, n_gb))
    gb_per_core = -(-n_gb // n_cores_used)
    g_pad = n_cores_used * gb_per_core * gt
    return gt, dt, d_pad, g_pad, gb_per_core, n_db, n_cores_used


def _sum_sq_dev(grouped_kgd, gt, dt, n_cores_used, gb_per_core, n_db,
                vmem_limit):
    """grouped_kgd: (K, g_pad, d_pad).  Returns sum over all elements of
    sum_k (x_k - mean_k)^2 (unnormalized)."""
    k_copies, g_pad, d_pad = grouped_kgd.shape
    itemsize = jnp.dtype(grouped_kgd.dtype).itemsize

    out = pl.pallas_call(
        _group_variance_kernel,
        out_shape=jax.ShapeDtypeStruct((n_cores_used, 8, 128), jnp.float32),
        grid_spec=pltpu.PrefetchScalarGridSpec(
            num_scalar_prefetch=0,
            grid=(n_cores_used, gb_per_core, n_db),
            in_specs=[pl.BlockSpec(
                (k_copies, gt, dt),
                lambda c, gb, db: (0, c * gb_per_core + gb, db))],
            out_specs=pl.BlockSpec((1, 8, 128), lambda c, gb, db: (c, 0, 0)),
            scratch_shapes=[pltpu.VMEM((8, 128), jnp.float32)],
        ),
        compiler_params=pltpu.CompilerParams(
            dimension_semantics=("parallel", "arbitrary", "arbitrary"),
            vmem_limit_bytes=vmem_limit,
        ),
        cost_estimate=pl.CostEstimate(
            flops=6 * k_copies * g_pad * d_pad,
            transcendentals=0,
            bytes_accessed=k_copies * g_pad * d_pad * itemsize
            + n_cores_used * 8 * 128 * 4,
        ),
    )(grouped_kgd)
    # Per-core (8, 128) partials: summing every element gives the total.
    return jnp.sum(out)


# ---------------------------------------------------------------------------
# Glue: D4 group transforms (rot90^r then optional horizontal flip)
# ---------------------------------------------------------------------------
def d4_transform(x, n_rot, flip):
    y = jnp.rot90(x, k=n_rot, axes=(-2, -1))
    if flip:
        y = jnp.flip(y, axis=-1)
    return y


def d4_inverse_transform(x, n_rot, flip):
    y = x
    if flip:
        y = jnp.flip(y, axis=-1)
    return jnp.rot90(y, k=-n_rot, axes=(-2, -1))


def _batched_d4_inverse(y_pred, group_elements):
    """Inverse-transform all samples back to the canonical frame, batched by
    the (at most 8) distinct D4 elements.  Returns (stacked, row_of) where
    stacked[row_of[i]] is the canonical view of input sample i.  The caller
    composes `row_of` into its own gather instead of materializing
    stacked[row_of] (saves one full HBM read+write pass)."""
    b = y_pred.shape[0]
    buckets = {}
    for i, (r, f) in enumerate(group_elements):
        buckets.setdefault((int(r) % 4, int(bool(f))), []).append(i)

    pieces, src = [], []
    for (r, f), idxs in buckets.items():
        if len(idxs) == b:
            sub = y_pred                            # single bucket: no gather
        else:
            sub = y_pred[np.asarray(idxs, dtype=np.int32)]
        if f:
            sub = jnp.flip(sub, axis=-1)
        if r:
            sub = jnp.rot90(sub, k=-r, axes=(-2, -1))
        pieces.append(sub)
        src.extend(idxs)

    stacked = pieces[0] if len(pieces) == 1 else jnp.concatenate(pieces, axis=0)
    row_of = np.empty(b, dtype=np.int64)
    row_of[np.asarray(src, dtype=np.int64)] = np.arange(b, dtype=np.int64)
    return stacked, row_of


# ---------------------------------------------------------------------------
# Loss.forward equivalent
# ---------------------------------------------------------------------------
def equivariance_error_single_size(y_pred, sample_ids, group_elements):
    """Per-size loss and number of unique sample ids (forward_single_size)."""
    b, c, h, w = y_pred.shape
    d = c * h * w

    stacked, row_of = _batched_d4_inverse(y_pred, group_elements)

    uniq = list(dict.fromkeys(sample_ids))
    members = [[i for i, s in enumerate(sample_ids) if s == u] for u in uniq]
    n_groups = len(uniq)
    k_copies = len(members[0])
    assert k_copies >= 2, "unbiased variance needs >= 2 augmentations per id"
    # TODO(synk): ragged sample-id groups (unequal member counts) are allowed
    # by the torch reference but not by this in-kernel (K, G, D) layout.
    assert all(len(m) == k_copies for m in members), "equal group sizes required"

    vmem_limit, block_budget, n_cores = _tpu_limits()
    itemsize = jnp.dtype(y_pred.dtype).itemsize
    gt, dt, d_pad, g_pad, gb_per_core, n_db, n_cores_used = _choose_tiles(
        n_groups, k_copies, d, itemsize, block_budget, n_cores)

    # Single composed gather: restore-permutation * group-index, built on the
    # host.  Padded groups reuse one fixed row for all K copies -> their
    # variance is exactly 0 and does not bias the accumulated sum.
    # TODO(synk): this materialized gather could be folded into the kernel via
    # a manual DMA gather (memory_space=pl.ANY + scalar-prefetched row table).
    idx = np.empty((k_copies, g_pad), dtype=np.int32)
    for g, m in enumerate(members):
        for k in range(k_copies):
            idx[k, g] = row_of[m[k]]
    if g_pad > n_groups:
        idx[:, n_groups:] = row_of[members[0][0]]
    grouped = stacked.reshape(b, d)[jnp.asarray(idx.reshape(-1))]
    grouped = grouped.reshape(k_copies, g_pad, d)
    if d_pad != d:
        # Zero lanes are identical across the K copies -> exactly 0 variance.
        grouped = jnp.pad(grouped, ((0, 0), (0, 0), (0, d_pad - d)))

    total = _sum_sq_dev(grouped, gt, dt, n_cores_used, gb_per_core, n_db,
                        vmem_limit)
    # torch.var(..., correction=1) + mean over the real G*D elements.
    loss = total / jnp.float32((k_copies - 1) * n_groups * d)
    return loss, n_groups


def equivariance_error_loss(model_output, sample_ids_list, group_elements_list):
    """model_output: list of (B, C, H, W) arrays (one per size)."""
    # TODO(synk): when every per-size tensor is tiny, the per-size pallas_call
    # launches could be fused into one call (concatenate along the group axis
    # with per-size normalization); kept separate here for clarity.
    losses, ns = [], []
    for y_pred, sids, elems in zip(model_output, sample_ids_list,
                                   group_elements_list):
        l, n = equivariance_error_single_size(y_pred, sids, elems)
        losses.append(l)
        ns.append(n)
    return sum(l * n for l, n in zip(losses, ns)) / sum(ns)


# ---------------------------------------------------------------------------
# Pure-JAX reference (mirrors the torch code literally, incl. duplicate ids)
# ---------------------------------------------------------------------------
def reference_loss(model_output, sample_ids_list, group_elements_list):
    losses_out, ns = [], []
    for y_pred, sample_ids, group_elems in zip(
            model_output, sample_ids_list, group_elements_list):
        y_orig = jnp.stack([
            d4_inverse_transform(y_pred[i], *group_elems[i])
            for i in range(y_pred.shape[0])
        ])
        per = []
        for sid in sample_ids:
            idx = jnp.array([i for i, s in enumerate(sample_ids) if s == sid])
            per.append(jnp.var(y_orig[idx], axis=0, ddof=1))
        losses_out.append(jnp.mean(jnp.stack(per)))
        ns.append(len(set(sample_ids)))
    return sum(l * n for l, n in zip(losses_out, ns)) / sum(ns)


# ---------------------------------------------------------------------------
if __name__ == "__main__":
    key = jax.random.PRNGKey(0)

    D4 = [(r, f) for f in (0, 1) for r in range(4)]   # 8 group elements
    sizes = [(4, 16, 16), (4, 8, 8)]                  # (C, H, W) per "size"
    groups_per_size = [3, 2]                          # unique sample ids
    K = 4                                             # augmentations per id

    model_output, sample_ids_list, group_elems_list = [], [], []
    for (C, H, W), G in zip(sizes, groups_per_size):
        key, k1, k2 = jax.random.split(key, 3)
        base = jax.random.normal(k1, (G, C, H, W), jnp.float32)
        noise = 0.05 * jax.random.normal(k2, (G, K, C, H, W), jnp.float32)
        samples, sids, elems = [], [], []
        for g in range(G):
            for j in range(K):
                r, f = D4[(g * K + j) % len(D4)]
                samples.append(d4_transform(base[g] + noise[g, j], r, f))
                sids.append(f"sample_{H}x{W}_{g}")
                elems.append((r, f))
        model_output.append(jnp.stack(samples))       # (G*K, C, H, W)
        sample_ids_list.append(sids)
        group_elems_list.append(elems)

    loss = equivariance_error_loss(model_output, sample_ids_list,
                                   group_elems_list)
    jax.block_until_ready(loss)

    ref = reference_loss(model_output, sample_ids_list, group_elems_list)
    assert jnp.allclose(loss, ref, rtol=1e-4, atol=1e-6), (loss, ref)

    print("KERNEL_OK")
</pallas_src>

<mosaic_0001>
module attributes {stable_mosaic.version = 11 : i64} {
  func.func @_group_variance_kernel(%arg0: i32, %arg1: i32, %arg2: i32, %arg3: memref<4x8x1024xf32, #tpu.memory_space<vmem>>, %arg4: memref<1x8x128xf32, #tpu.memory_space<vmem>>, %arg5: memref<8x128xf32, #tpu.memory_space<vmem>>) attributes {dimension_semantics = [#tpu.dimension_semantics<parallel>, #tpu.dimension_semantics<arbitrary>, #tpu.dimension_semantics<arbitrary>], iteration_bounds = array<i64: 1, 1, 1>, scalar_prefetch = 0 : i64, scratch_operands = 1 : i64, tpu.core_type = #tpu.core_type<tc>, window_params = [{transform_indices = @transform_0, window_bounds = array<i64: 4, 8, 1024>}, {transform_indices = @transform_1, window_bounds = array<i64: 1, 8, 128>}]} {
    %c0_i32 = arith.constant 0 : i32
    %0 = arith.cmpi eq, %arg1, %c0_i32 : i32
    %c0_i32_0 = arith.constant 0 : i32
    %1 = arith.cmpi eq, %arg2, %c0_i32_0 : i32
    %2 = arith.andi %0, %1 : i1
    %3 = arith.extui %2 : i1 to i32
    %c0_i32_1 = arith.constant 0 : i32
    %4 = arith.cmpi ne, %3, %c0_i32_1 : i32
    scf.if %4 {
      %cst_19 = arith.constant 0.000000e+00 : f32
      %54 = vector.broadcast %cst_19 : f32 to vector<8x128xf32>
      %c0_20 = arith.constant 0 : index
      %c0_21 = arith.constant 0 : index
      %55 = vector.load %arg5[%c0_20, %c0_21] : memref<8x128xf32, #tpu.memory_space<vmem>>, vector<8x128xf32>
      tpu.vector_store %arg5[%c0_20, %c0_21], %54 {strides = array<i32>} : memref<8x128xf32, #tpu.memory_space<vmem>>, vector<8x128xf32>,
    } else {
    }
    %c0 = arith.constant 0 : index
    %c0_2 = arith.constant 0 : index
    %c0_3 = arith.constant 0 : index
    %5 = vector.load %arg3[%c0, %c0_2, %c0_3] : memref<4x8x1024xf32, #tpu.memory_space<vmem>>, vector<1x8x1024xf32>
    %6 = vector.shape_cast %5 : vector<1x8x1024xf32> to vector<8x1024xf32>
    %cst = arith.constant 0.000000e+00 : f32
    %7 = vector.broadcast %cst : f32 to vector<8x1024xf32>
    %cst_4 = arith.constant 0.000000e+00 : f32
    %8 = vector.broadcast %cst_4 : f32 to vector<8x1024xf32>
    %c1 = arith.constant 1 : index
    %c0_5 = arith.constant 0 : index
    %c0_6 = arith.constant 0 : index
    %9 = vector.load %arg3[%c1, %c0_5, %c0_6] : memref<4x8x1024xf32, #tpu.memory_space<vmem>>, vector<1x8x1024xf32>
    %10 = vector.shape_cast %9 : vector<1x8x1024xf32> to vector<8x1024xf32>
    %11 = arith.subf %10, %6 : vector<8x1024xf32>
    %12 = arith.addf %7, %11 : vector<8x1024xf32>
    %13 = arith.mulf %11, %11 : vector<8x1024xf32>
    %14 = arith.addf %8, %13 : vector<8x1024xf32>
    %c2 = arith.constant 2 : index
    %c0_7 = arith.constant 0 : index
    %c0_8 = arith.constant 0 : index
    %15 = vector.load %arg3[%c2, %c0_7, %c0_8] : memref<4x8x1024xf32, #tpu.memory_space<vmem>>, vector<1x8x1024xf32>
    %16 = vector.shape_cast %15 : vector<1x8x1024xf32> to vector<8x1024xf32>
    %17 = arith.subf %16, %6 : vector<8x1024xf32>
    %18 = arith.addf %12, %17 : vector<8x1024xf32>
    %19 = arith.mulf %17, %17 : vector<8x1024xf32>
    %20 = arith.addf %14, %19 : vector<8x1024xf32>
    %c3 = arith.constant 3 : index
    %c0_9 = arith.constant 0 : index
    %c0_10 = arith.constant 0 : index
    %21 = vector.load %arg3[%c3, %c0_9, %c0_10] : memref<4x8x1024xf32, #tpu.memory_space<vmem>>, vector<1x8x1024xf32>
    %22 = vector.shape_cast %21 : vector<1x8x1024xf32> to vector<8x1024xf32>
    %23 = arith.subf %22, %6 : vector<8x1024xf32>
    %24 = arith.addf %18, %23 : vector<8x1024xf32>
    %25 = arith.mulf %23, %23 : vector<8x1024xf32>
    %26 = arith.addf %20, %25 : vector<8x1024xf32>
    %27 = arith.mulf %24, %24 : vector<8x1024xf32>
    %cst_11 = arith.constant 2.500000e-01 : f32
    %28 = vector.broadcast %cst_11 : f32 to vector<8x1024xf32>
    %29 = arith.mulf %27, %28 : vector<8x1024xf32>
    %30 = arith.subf %26, %29 : vector<8x1024xf32>
    %31 = vector.extract_strided_slice %30 {offsets = [0, 0], sizes = [8, 128], strides = [1, 1]} : vector<8x1024xf32> to vector<8x128xf32>
    %32 = vector.extract_strided_slice %30 {offsets = [0, 128], sizes = [8, 128], strides = [1, 1]} : vector<8x1024xf32> to vector<8x128xf32>
    %33 = arith.addf %31, %32 : vector<8x128xf32>
    %34 = vector.extract_strided_slice %30 {offsets = [0, 256], sizes = [8, 128], strides = [1, 1]} : vector<8x1024xf32> to vector<8x128xf32>
    %35 = arith.addf %33, %34 : vector<8x128xf32>
    %36 = vector.extract_strided_slice %30 {offsets = [0, 384], sizes = [8, 128], strides = [1, 1]} : vector<8x1024xf32> to vector<8x128xf32>
    %37 = arith.addf %35, %36 : vector<8x128xf32>
    %38 = vector.extract_strided_slice %30 {offsets = [0, 512], sizes = [8, 128], strides = [1, 1]} : vector<8x1024xf32> to vector<8x128xf32>
    %39 = arith.addf %37, %38 : vector<8x128xf32>
    %40 = vector.extract_strided_slice %30 {offsets = [0, 640], sizes = [8, 128], strides = [1, 1]} : vector<8x1024xf32> to vector<8x128xf32>
    %41 = arith.addf %39, %40 : vector<8x128xf32>
    %42 = vector.extract_strided_slice %30 {offsets = [0, 768], sizes = [8, 128], strides = [1, 1]} : vector<8x1024xf32> to vector<8x128xf32>
    %43 = arith.addf %41, %42 : vector<8x128xf32>
    %44 = vector.extract_strided_slice %30 {offsets = [0, 896], sizes = [8, 128], strides = [1, 1]} : vector<8x1024xf32> to vector<8x128xf32>
    %45 = arith.addf %43, %44 : vector<8x128xf32>
    %c0_12 = arith.constant 0 : index
    %c0_13 = arith.constant 0 : index
    %46 = vector.load %arg5[%c0_12, %c0_13] : memref<8x128xf32, #tpu.memory_space<vmem>>, vector<8x128xf32>
    %47 = arith.addf %46, %45 : vector<8x128xf32>
    %c0_14 = arith.constant 0 : index
    %c0_15 = arith.constant 0 : index
    %48 = vector.load %arg5[%c0_14, %c0_15] : memref<8x128xf32, #tpu.memory_space<vmem>>, vector<8x128xf32>
    tpu.vector_store %arg5[%c0_14, %c0_15], %47 {strides = array<i32>} : memref<8x128xf32, #tpu.memory_space<vmem>>, vector<8x128xf32>,
    %c0_i32_16 = arith.constant 0 : i32
    %49 = arith.cmpi eq, %arg1, %c0_i32_16 : i32
    %c0_i32_17 = arith.constant 0 : i32
    %50 = arith.cmpi eq, %arg2, %c0_i32_17 : i32
    %51 = arith.andi %49, %50 : i1
    %52 = arith.extui %51 : i1 to i32
    %c0_i32_18 = arith.constant 0 : i32
    %53 = arith.cmpi ne, %52, %c0_i32_18 : i32
    scf.if %53 {
      %c0_19 = arith.constant 0 : index
      %c0_20 = arith.constant 0 : index
      %54 = vector.load %arg5[%c0_19, %c0_20] : memref<8x128xf32, #tpu.memory_space<vmem>>, vector<8x128xf32>
      %c0_21 = arith.constant 0 : index
      %c0_22 = arith.constant 0 : index
      %c0_23 = arith.constant 0 : index
      %55 = vector.load %arg4[%c0_21, %c0_22, %c0_23] : memref<1x8x128xf32, #tpu.memory_space<vmem>>, vector<1x8x128xf32>
      %56 = vector.shape_cast %55 : vector<1x8x128xf32> to vector<8x128xf32>
      %57 = vector.shape_cast %54 : vector<8x128xf32> to vector<1x8x128xf32>
      tpu.vector_store %arg4[%c0_21, %c0_22, %c0_23], %57 {strides = array<i32>} : memref<1x8x128xf32, #tpu.memory_space<vmem>>, vector<1x8x128xf32>,
    } else {
    }
    return
  }
  func.func @transform_0(%arg0: i32, %arg1: i32, %arg2: i32) -> (i32, i32, i32) {
    %c1_i32 = arith.constant 1 : i32
    %0 = arith.muli %arg0, %c1_i32 : i32
    %1 = arith.addi %0, %arg1 : i32
    %c0_i32 = arith.constant 0 : i32
    %c0_i32_0 = arith.constant 0 : i32
    return %c0_i32, %1, %arg2 : i32, i32, i32
  }
  func.func @transform_1(%arg0: i32, %arg1: i32, %arg2: i32) -> (i32, i32, i32) {
    %c0_i32 = arith.constant 0 : i32
    %c0_i32_0 = arith.constant 0 : i32
    %c0_i32_1 = arith.constant 0 : i32
    return %arg0, %c0_i32, %c0_i32_0 : i32, i32, i32
  }
}

</mosaic_0001>

<llo_original>
// kernel: tpu_custom_call.1
$region0: #{tpu_custom_call.1}
  #allocation0 [shape = 'u32[]', space=smem, size = 0x4, offset = 0x4, fixed_abs, tag = 'smem constant byte address 0x4 - core index']
  #allocation1 [shape = 'u32[72,128]{1,0:T(1,128)}', space=vmem, size = 0x9000, scoped, tag = 'internal scratch']
  #allocation2 [shape = 'f32[8,128]{1,0:T(8,128)}', space=vmem, size = 0x1000, scoped, tag = 'scratch operand']
  %s0 = inlined_call_operand.hbm [shape: f32[4,8,1024], index: 0, kind: input, shape index: {}]
  %s1 = inlined_call_operand.hbm [shape: f32[1,8,128], index: 1, kind: output, shape index: {}]
  %s2 = sld [smem:[#allocation0]]
  $region26: #{tpu_custom_call.1} parent=0
    _
  %s4 = ssub.s32 1, %s2
  %s5 = scalar_select 0, %s4, %s2
  $region1: #{tpu_custom_call.1} parent=0
    #allocation3 [shape = 'u8[131072]{0}', space=vmem, size = 0x20000, scoped, tag = 'input window, operand 0, single buffered']
    #allocation4 [shape = 's32[1]{0}', space=sflag, size = 0x4, scoped, tag = 'scoped memory for tpu_custom_call.1']
    #allocation5 [shape = 's32[1]{0}', space=sflag, size = 0x4, scoped, tag = 'scoped memory for tpu_custom_call.1']
    #allocation6 [shape = 'u8[4096]{0}', space=vmem, size = 0x1000, scoped, tag = 'output window, operand 0, single buffered']
    %6 = vsyncpa [#allocation4], 0
    %7 = vsyncpa [#allocation5], 0
    // Predicated region
    $region2: #{tpu_custom_call.1} parent=1 // pred_check
      _
    $region3: #{tpu_custom_call.1} parent=1 // pred_check_branch
      %9 = sbr.rel (0) target = $region5
    $region4: #{tpu_custom_call.1} parent=1 // pred_region
      %s10 = sadd.s32 0, 0
      %12 = vsyncadd [#allocation4], 0
      %s13 = smul.addr %s10, 8
      %s14 = smul.addr %s13, 8
      %s15 = scalar_lea.hbm %s0, %s14
      %s16 = sshll.u32 %s15, 4
      %s17 = int_to_ptr.hbm [resolvable:$true] %s16
      %s18 = sshll.u32 [#allocation3], 4
      %s19 = int_to_ptr.vmem [resolvable:$true] %s18
      %24 = dma.hbm_to_vmem [thread:$0]  %s17, 4096, %s19, [#allocation4], 1024, 1024, 64
    $region5: #{tpu_custom_call.1} parent=1 // pred_fallthru
      _
    // Predicated region
    $region6: #{tpu_custom_call.1} parent=1 // pred_check
      _
    $region7: #{tpu_custom_call.1} parent=1 // pred_check_branch
      %26 = sbr.rel (0) target = $region9
    $region8: #{tpu_custom_call.1} parent=1 // pred_region
      %28 = dma.done [#allocation4], 4096
    $region9: #{tpu_custom_call.1} parent=1 // pred_fallthru
      _
    %s29 = sadd.s32 0, 0
    %p30 = scmp.eq.s32.totalorder 0, 0
    %p31 = scmp.eq.s32.totalorder 0, 0
    %p32 = pnand %p30, %p31
    %p33 = pneg %p32
    // Predicated region
    $region10: #{tpu_custom_call.1} parent=1 // pred_check
      _
    $region11: #{tpu_custom_call.1} parent=1 // pred_check_branch
      %35 = sbr.rel (%p32) target = $region13
    $region12: #{tpu_custom_call.1} parent=1 // pred_region
      %36 = vst [vmem:[#allocation2] sm:$0xff] 0.0
    $region13: #{tpu_custom_call.1} parent=1 // pred_fallthru
      _
    %v37 = vld [vmem:[#allocation3] sm:$0xff]
    %v38 = vld [vmem:[#allocation3 + $0x8] sm:$0xff]
    %v39 = vld [vmem:[#allocation3 + $0x10] sm:$0xff]
    %v40 = vld [vmem:[#allocation3 + $0x18] sm:$0xff]
    %v41 = vld [vmem:[#allocation3 + $0x20] sm:$0xff]
    %v42 = vld [vmem:[#allocation3 + $0x28] sm:$0xff]
    %v43 = vld [vmem:[#allocation3 + $0x30] sm:$0xff]
    %v44 = vld [vmem:[#allocation3 + $0x38] sm:$0xff]
    %s45 = scalar_lea.vmem [#allocation3], 64
    %v46 = vld [vmem:[%s45] sm:$0xff]
    %v47 = vld [vmem:[%s45 + $0x8] sm:$0xff]
    %v48 = vld [vmem:[%s45 + $0x10] sm:$0xff]
    %v49 = vld [vmem:[%s45 + $0x18] sm:$0xff]
    %v50 = vld [vmem:[%s45 + $0x20] sm:$0xff]
    %v51 = vld [vmem:[%s45 + $0x28] sm:$0xff]
    %v52 = vld [vmem:[%s45 + $0x30] sm:$0xff]
    %v53 = vld [vmem:[%s45 + $0x38] sm:$0xff]
    %v54 = vsub.f32 %v46, %v37
    %v55 = vsub.f32 %v47, %v38
    %v56 = vsub.f32 %v48, %v39
    %v57 = vsub.f32 %v49, %v40
    %v58 = vsub.f32 %v50, %v41
    %v59 = vsub.f32 %v51, %v42
    %v60 = vsub.f32 %v52, %v43
    %v61 = vsub.f32 %v53, %v44
    %v62 = vadd.f32 %v54, 0.0
    %v63 = vadd.f32 %v55, 0.0
    %v64 = vadd.f32 %v56, 0.0
    %v65 = vadd.f32 %v57, 0.0
    %v66 = vadd.f32 %v58, 0.0
    %v67 = vadd.f32 %v59, 0.0
    %v68 = vadd.f32 %v60, 0.0
    %v69 = vadd.f32 %v61, 0.0
    %v70 = vmul.f32 %v54, %v54
    %v71 = vmul.f32 %v55, %v55
    %v72 = vmul.f32 %v56, %v56
    %v73 = vmul.f32 %v57, %v57
    %v74 = vmul.f32 %v58, %v58
    %v75 = vmul.f32 %v59, %v59
    %v76 = vmul.f32 %v60, %v60
    %v77 = vmul.f32 %v61, %v61
    %v78 = vadd.f32 %v70, 0.0
    %v79 = vadd.f32 %v71, 0.0
    %v80 = vadd.f32 %v72, 0.0
    %v81 = vadd.f32 %v73, 0.0
    %v82 = vadd.f32 %v74, 0.0
    %v83 = vadd.f32 %v75, 0.0
    %v84 = vadd.f32 %v76, 0.0
    %v85 = vadd.f32 %v77, 0.0
    %s86 = scalar_lea.vmem [#allocation3], 128
    %v87 = vld [vmem:[%s86] sm:$0xff]
    %v88 = vld [vmem:[%s86 + $0x8] sm:$0xff]
    %v89 = vld [vmem:[%s86 + $0x10] sm:$0xff]
    %v90 = vld [vmem:[%s86 + $0x18] sm:$0xff]
    %v91 = vld [vmem:[%s86 + $0x20] sm:$0xff]
    %v92 = vld [vmem:[%s86 + $0x28] sm:$0xff]
    %v93 = vld [vmem:[%s86 + $0x30] sm:$0xff]
    %v94 = vld [vmem:[%s86 + $0x38] sm:$0xff]
    %v95 = vsub.f32 %v87, %v37
    %v96 = vsub.f32 %v88, %v38
    %v97 = vsub.f32 %v89, %v39
    %v98 = vsub.f32 %v90, %v40
    %v99 = vsub.f32 %v91, %v41
    %v100 = vsub.f32 %v92, %v42
    %v101 = vsub.f32 %v93, %v43
    %v102 = vsub.f32 %v94, %v44
    %v103 = vadd.f32 %v62, %v95
    %v104 = vadd.f32 %v63, %v96
    %v105 = vadd.f32 %v64, %v97
    %v106 = vadd.f32 %v65, %v98
    %v107 = vadd.f32 %v66, %v99
    %v108 = vadd.f32 %v67, %v100
    %v109 = vadd.f32 %v68, %v101
    %v110 = vadd.f32 %v69, %v102
    %v111 = vmul.f32 %v95, %v95
    %v112 = vmul.f32 %v96, %v96
    %v113 = vmul.f32 %v97, %v97
    %v114 = vmul.f32 %v98, %v98
    %v115 = vmul.f32 %v99, %v99
    %v116 = vmul.f32 %v100, %v100
    %v117 = vmul.f32 %v101, %v101
    %v118 = vmul.f32 %v102, %v102
    %v119 = vadd.f32 %v78, %v111
    %v120 = vadd.f32 %v79, %v112
    %v121 = vadd.f32 %v80, %v113
    %v122 = vadd.f32 %v81, %v114
    %v123 = vadd.f32 %v82, %v115
    %v124 = vadd.f32 %v83, %v116
    %v125 = vadd.f32 %v84, %v117
    %v126 = vadd.f32 %v85, %v118
    %s127 = scalar_lea.vmem [#allocation3], 192
    %v128 = vld [vmem:[%s127] sm:$0xff]
    %v129 = vld [vmem:[%s127 + $0x8] sm:$0xff]
    %v130 = vld [vmem:[%s127 + $0x10] sm:$0xff]
    %v131 = vld [vmem:[%s127 + $0x18] sm:$0xff]
    %v132 = vld [vmem:[%s127 + $0x20] sm:$0xff]
    %v133 = vld [vmem:[%s127 + $0x28] sm:$0xff]
    %v134 = vld [vmem:[%s127 + $0x30] sm:$0xff]
    %v135 = vld [vmem:[%s127 + $0x38] sm:$0xff]
    %v136 = vsub.f32 %v128, %v37
    %v137 = vsub.f32 %v129, %v38
    %v138 = vsub.f32 %v130, %v39
    %v139 = vsub.f32 %v131, %v40
    %v140 = vsub.f32 %v132, %v41
    %v141 = vsub.f32 %v133, %v42
    %v142 = vsub.f32 %v134, %v43
    %v143 = vsub.f32 %v135, %v44
    %v144 = vadd.f32 %v103, %v136
    %v145 = vadd.f32 %v104, %v137
    %v146 = vadd.f32 %v105, %v138
    %v147 = vadd.f32 %v106, %v139
    %v148 = vadd.f32 %v107, %v140
    %v149 = vadd.f32 %v108, %v141
    %v150 = vadd.f32 %v109, %v142
    %v151 = vadd.f32 %v110, %v143
    %v152 = vmul.f32 %v136, %v136
    %v153 = vmul.f32 %v137, %v137
    %v154 = vmul.f32 %v138, %v138
    %v155 = vmul.f32 %v139, %v139
    %v156 = vmul.f32 %v140, %v140
    %v157 = vmul.f32 %v141, %v141
    %v158 = vmul.f32 %v142, %v142
    %v159 = vmul.f32 %v143, %v143
    %v160 = vadd.f32 %v119, %v152
    %v161 = vadd.f32 %v120, %v153
    %v162 = vadd.f32 %v121, %v154
    %v163 = vadd.f32 %v122, %v155
    %v164 = vadd.f32 %v123, %v156
    %v165 = vadd.f32 %v124, %v157
    %v166 = vadd.f32 %v125, %v158
    %v167 = vadd.f32 %v126, %v159
    %v168 = vmul.f32 %v144, %v144
    %v169 = vmul.f32 %v145, %v145
    %v170 = vmul.f32 %v146, %v146
    %v171 = vmul.f32 %v147, %v147
    %v172 = vmul.f32 %v148, %v148
    %v173 = vmul.f32 %v149, %v149
    %v174 = vmul.f32 %v150, %v150
    %v175 = vmul.f32 %v151, %v151
    %v176 = vmul.f32 %v168, 0.25
    %v177 = vmul.f32 %v169, 0.25
    %v178 = vmul.f32 %v170, 0.25
    %v179 = vmul.f32 %v171, 0.25
    %v180 = vmul.f32 %v172, 0.25
    %v181 = vmul.f32 %v173, 0.25
    %v182 = vmul.f32 %v174, 0.25
    %v183 = vmul.f32 %v175, 0.25
    %v184 = vsub.f32 %v160, %v176
    %v185 = vsub.f32 %v161, %v177
    %v186 = vsub.f32 %v162, %v178
    %v187 = vsub.f32 %v163, %v179
    %v188 = vsub.f32 %v164, %v180
    %v189 = vsub.f32 %v165, %v181
    %v190 = vsub.f32 %v166, %v182
    %v191 = vsub.f32 %v167, %v183
    %v192 = vadd.f32 %v184, %v185
    %v193 = vadd.f32 %v192, %v186
    %v194 = vadd.f32 %v193, %v187
    %v195 = vadd.f32 %v194, %v188
    %v196 = vadd.f32 %v195, %v189
    %v197 = vadd.f32 %v196, %v190
    %v198 = vadd.f32 %v197, %v191
    %v199 = vld [vmem:[#allocation2] sm:$0xff]
    %v200 = vadd.f32 %v199, %v198
    %201 = vst [vmem:[#allocation2] sm:$0xff] %v200
    // Predicated region
    $region14: #{tpu_custom_call.1} parent=1 // pred_check
      _
    $region15: #{tpu_custom_call.1} parent=1 // pred_check_branch
      %203 = sbr.rel (%p32) target = $region17
    $region16: #{tpu_custom_call.1} parent=1 // pred_region
      %v204 = vld [vmem:[#allocation2] sm:$0xff]
      %205 = vst [vmem:[#allocation6] sm:$0xff] %v204
    $region17: #{tpu_custom_call.1} parent=1 // pred_fallthru
      _
    // Predicated region
    $region18: #{tpu_custom_call.1} parent=1 // pred_check
      _
    $region19: #{tpu_custom_call.1} parent=1 // pred_check_branch
      %207 = sbr.rel (0) target = $region21
    $region20: #{tpu_custom_call.1} parent=1 // pred_region
      %209 = vsyncadd [#allocation5], 0
      %s211 = sshll.u32 [#allocation6], 4
      %s212 = int_to_ptr.vmem [resolvable:$true] %s211
      %s213 = sshll.u32 %s1, 4
      %s214 = int_to_ptr.hbm [resolvable:$true] %s213
      %216 = dma.vmem_to_hbm [thread:$0]  %s212, 128, %s214, [#allocation5]
    $region21: #{tpu_custom_call.1} parent=1 // pred_fallthru
      _
    // Predicated region
    $region22: #{tpu_custom_call.1} parent=1 // pred_check
      _
    $region23: #{tpu_custom_call.1} parent=1 // pred_check_branch
      %218 = sbr.rel (0) target = $region25
    $region24: #{tpu_custom_call.1} parent=1 // pred_region
      %220 = dma.done [#allocation5], 128
    $region25: #{tpu_custom_call.1} parent=1 // pred_fallthru
      _
    %221 = vsyncpa [#allocation4], 1
    %222 = vsyncpa [#allocation5], 1

</llo_original>
